<compile_context>
chip_gen: v7x
topology: tpu7x:2x2x1
jax: 0.10.0
libtpu: 0.0.40
codegen_flags: <defaults>
</compile_context>

<pallas_src>
import functools

import jax
import jax.numpy as jnp
from jax.experimental import pallas as pl
from jax.experimental.pallas import tpu as pltpu


def _round_up(x, m):
    return ((x + m - 1) // m) * m


def _mlp_kernel(x_ref, w1_ref, b1_ref, w2_ref, b2_ref, o_ref):
    # encode: Linear(input_dim -> hidden) + bias + ReLU   (f32 accumulate on MXU)
    h = jnp.dot(x_ref[...], w1_ref[...], preferred_element_type=jnp.float32)
    h = jnp.maximum(h + b1_ref[...], 0.0)
    # TODO(synk): Dropout(0.5) is identity in eval mode; training-mode dropout
    # would use pltpu.prng_seed / pltpu.prng_random_bits here.
    # decode: Linear(hidden -> out_dim) + bias + ReLU
    y = jnp.dot(h, w2_ref[...], preferred_element_type=jnp.float32)
    y = jnp.maximum(y + b2_ref[...], 0.0)
    o_ref[...] = y.astype(o_ref.dtype)


def prepare_params(w1, b1, w2, b2):
    """One-time (load-time) prep: transpose PyTorch-convention weights.
    w1: (hidden, input_dim), b1: (hidden,), w2: (out_dim, hidden), b2: (out_dim,).
    Everything stays f32 (kernel is HBM-bound; f32 keeps exact module parity)."""
    w1_t = jnp.transpose(w1).astype(jnp.float32)          # (input_dim, hidden)
    b1_r = jnp.reshape(b1, (1, -1)).astype(jnp.float32)   # (1, hidden)
    w2_t = jnp.transpose(w2).astype(jnp.float32)          # (hidden, out_dim)
    b2_r = jnp.reshape(b2, (1, -1)).astype(jnp.float32)   # (1, out_dim)
    return w1_t, b1_r, w2_t, b2_r


@functools.partial(jax.jit, static_argnames=("tile_b",))
def logistic_regression_forward(x, w1_t, b1_r, w2_t, b2_r, *, tile_b=8192):
    """x: (B, input_dim) f32; params from prepare_params. Returns (B, out_dim) f32."""
    B, input_dim = x.shape
    hidden = w1_t.shape[1]
    out_dim = w2_t.shape[1]

    # Largest sensible tile: never exceed the (row-aligned) batch, and keep the
    # grid at >=4 steps when B is large so v7x can shard work over both TCs.
    tile_b = min(tile_b, _round_up(B, 8))
    tile_b = max(8, min(tile_b, _round_up(pl.cdiv(B, 4), 8)))
    grid = (pl.cdiv(B, tile_b),)

    out = pl.pallas_call(
        _mlp_kernel,
        out_shape=jax.ShapeDtypeStruct((B, out_dim), jnp.float32),
        grid_spec=pltpu.PrefetchScalarGridSpec(
            num_scalar_prefetch=0,
            grid=grid,
            in_specs=[
                pl.BlockSpec((tile_b, input_dim), lambda i: (i, 0)),  # streamed
                pl.BlockSpec((input_dim, hidden), lambda i: (0, 0)),  # resident
                pl.BlockSpec((1, hidden), lambda i: (0, 0)),          # resident
                pl.BlockSpec((hidden, out_dim), lambda i: (0, 0)),    # resident
                pl.BlockSpec((1, out_dim), lambda i: (0, 0)),         # resident
            ],
            out_specs=pl.BlockSpec((tile_b, out_dim), lambda i: (i, 0)),
        ),
        compiler_params=pltpu.CompilerParams(
            dimension_semantics=("parallel",),   # lets v7x shard batch over 2 TCs
            vmem_limit_bytes=32 * 1024 * 1024,   # portability guard only; tiles are ~3-4 MiB
        ),
    )(x, w1_t, b1_r, w2_t, b2_r)

    # TODO(synk): emit bf16 output here if downstream consumers tolerate it
    # (halves the remaining writeback); kept f32 for exact module parity.
    return out


if __name__ == "__main__":
    # Small shapes consistent with the module: input_dim=32, hidden=64, output_dim=16
    B, input_dim, hidden_dim, output_dim = 8, 32, 64, 16

    key = jax.random.PRNGKey(0)
    kx, kw1, kb1, kw2, kb2 = jax.random.split(key, 5)

    x = jax.random.normal(kx, (B, input_dim), dtype=jnp.float32)
    # PyTorch nn.Linear parameter shapes: weight (out, in), bias (out,)
    w1 = jax.random.normal(kw1, (hidden_dim, input_dim), dtype=jnp.float32) * 0.1
    b1 = jax.random.normal(kb1, (hidden_dim,), dtype=jnp.float32) * 0.1
    w2 = jax.random.normal(kw2, (output_dim, hidden_dim), dtype=jnp.float32) * 0.1
    b2 = jax.random.normal(kb2, (output_dim,), dtype=jnp.float32) * 0.1

    # One-time param prep (transpose only) -- outside the per-call path.
    w1_t, b1_r, w2_t, b2_r = prepare_params(w1, b1, w2, b2)

    out = logistic_regression_forward(x, w1_t, b1_r, w2_t, b2_r)
    out = jax.block_until_ready(out)

    # Pure-JAX f32 reference (eval-mode semantics). Full-f32 kernel -> tight tolerance.
    ref = jnp.maximum(jnp.maximum(x @ w1.T + b1, 0.0) @ w2.T + b2, 0.0)
    assert out.shape == (B, output_dim)
    assert jnp.allclose(out, ref, atol=1e-5, rtol=1e-5)

    print("KERNEL_OK")
</pallas_src>

<mosaic_0001>
module attributes {stable_mosaic.version = 11 : i64} {
  func.func @_mlp_kernel(%arg0: i32, %arg1: memref<8x32xf32, #tpu.memory_space<vmem>>, %arg2: memref<32x64xf32, #tpu.memory_space<vmem>>, %arg3: memref<1x64xf32, #tpu.memory_space<vmem>>, %arg4: memref<64x16xf32, #tpu.memory_space<vmem>>, %arg5: memref<1x16xf32, #tpu.memory_space<vmem>>, %arg6: memref<8x16xf32, #tpu.memory_space<vmem>>) attributes {dimension_semantics = [#tpu.dimension_semantics<parallel>], iteration_bounds = array<i64: 1>, scalar_prefetch = 0 : i64, scratch_operands = 0 : i64, tpu.core_type = #tpu.core_type<tc>, window_params = [{transform_indices = @transform_0, window_bounds = array<i64: 8, 32>}, {pipeline_mode = #tpu.pipeline_mode<synchronous>, transform_indices = @transform_1, window_bounds = array<i64: 32, 64>}, {pipeline_mode = #tpu.pipeline_mode<synchronous>, transform_indices = @transform_2, window_bounds = array<i64: 1, 64>}, {pipeline_mode = #tpu.pipeline_mode<synchronous>, transform_indices = @transform_3, window_bounds = array<i64: 64, 16>}, {pipeline_mode = #tpu.pipeline_mode<synchronous>, transform_indices = @transform_4, window_bounds = array<i64: 1, 16>}, {transform_indices = @transform_5, window_bounds = array<i64: 8, 16>}]} {
    %c0 = arith.constant 0 : index
    %c0_0 = arith.constant 0 : index
    %0 = vector.load %arg1[%c0, %c0_0] : memref<8x32xf32, #tpu.memory_space<vmem>>, vector<8x32xf32>
    %c0_1 = arith.constant 0 : index
    %c0_2 = arith.constant 0 : index
    %1 = vector.load %arg2[%c0_1, %c0_2] : memref<32x64xf32, #tpu.memory_space<vmem>>, vector<32x64xf32>
    %cst = arith.constant dense<0.000000e+00> : vector<8x64xf32>
    %2 = tpu.matmul %0, %1, %cst {dimension_numbers = #tpu.dot_dimension_numbers<[1], [0], [0], [1], [0, 0, 1, 1], [], []>} : vector<8x32xf32>, vector<32x64xf32>, vector<8x64xf32> -> vector<8x64xf32>
    %c0_3 = arith.constant 0 : index
    %c0_4 = arith.constant 0 : index
    %3 = vector.load %arg3[%c0_3, %c0_4] : memref<1x64xf32, #tpu.memory_space<vmem>>, vector<1x64xf32>
    %4 = vector.broadcast %3 : vector<1x64xf32> to vector<8x64xf32>
    %5 = arith.addf %2, %4 : vector<8x64xf32>
    %cst_5 = arith.constant 0.000000e+00 : f32
    %6 = vector.broadcast %cst_5 : f32 to vector<8x64xf32>
    %7 = arith.maximumf %5, %6 : vector<8x64xf32>
    %c0_6 = arith.constant 0 : index
    %c0_7 = arith.constant 0 : index
    %8 = vector.load %arg4[%c0_6, %c0_7] : memref<64x16xf32, #tpu.memory_space<vmem>>, vector<64x16xf32>
    %cst_8 = arith.constant dense<0.000000e+00> : vector<8x16xf32>
    %9 = tpu.matmul %7, %8, %cst_8 {dimension_numbers = #tpu.dot_dimension_numbers<[1], [0], [0], [1], [0, 0, 1, 1], [], []>} : vector<8x64xf32>, vector<64x16xf32>, vector<8x16xf32> -> vector<8x16xf32>
    %c0_9 = arith.constant 0 : index
    %c0_10 = arith.constant 0 : index
    %10 = vector.load %arg5[%c0_9, %c0_10] : memref<1x16xf32, #tpu.memory_space<vmem>>, vector<1x16xf32>
    %11 = vector.broadcast %10 : vector<1x16xf32> to vector<8x16xf32>
    %12 = arith.addf %9, %11 : vector<8x16xf32>
    %cst_11 = arith.constant 0.000000e+00 : f32
    %13 = vector.broadcast %cst_11 : f32 to vector<8x16xf32>
    %14 = arith.maximumf %12, %13 : vector<8x16xf32>
    %c0_12 = arith.constant 0 : index
    %c0_13 = arith.constant 0 : index
    %15 = vector.load %arg6[%c0_12, %c0_13] : memref<8x16xf32, #tpu.memory_space<vmem>>, vector<8x16xf32>
    tpu.vector_store %arg6[%c0_12, %c0_13], %14 {strides = array<i32>} : memref<8x16xf32, #tpu.memory_space<vmem>>, vector<8x16xf32>,
    return
  }
  func.func @transform_0(%arg0: i32) -> (i32, i32) {
    %c0_i32 = arith.constant 0 : i32
    %c0_i32_0 = arith.constant 0 : i32
    return %arg0, %c0_i32 : i32, i32
  }
  func.func @transform_1(%arg0: i32) -> (i32, i32) {
    %c0_i32 = arith.constant 0 : i32
    %c0_i32_0 = arith.constant 0 : i32
    %c0_i32_1 = arith.constant 0 : i32
    return %c0_i32, %c0_i32_0 : i32, i32
  }
  func.func @transform_2(%arg0: i32) -> (i32, i32) {
    %c0_i32 = arith.constant 0 : i32
    %c0_i32_0 = arith.constant 0 : i32
    %c0_i32_1 = arith.constant 0 : i32
    return %c0_i32, %c0_i32_0 : i32, i32
  }
  func.func @transform_3(%arg0: i32) -> (i32, i32) {
    %c0_i32 = arith.constant 0 : i32
    %c0_i32_0 = arith.constant 0 : i32
    %c0_i32_1 = arith.constant 0 : i32
    return %c0_i32, %c0_i32_0 : i32, i32
  }
  func.func @transform_4(%arg0: i32) -> (i32, i32) {
    %c0_i32 = arith.constant 0 : i32
    %c0_i32_0 = arith.constant 0 : i32
    %c0_i32_1 = arith.constant 0 : i32
    return %c0_i32, %c0_i32_0 : i32, i32
  }
  func.func @transform_5(%arg0: i32) -> (i32, i32) {
    %c0_i32 = arith.constant 0 : i32
    %c0_i32_0 = arith.constant 0 : i32
    return %arg0, %c0_i32 : i32, i32
  }
}

</mosaic_0001>

<llo_original>
// kernel: logistic_regression_forward.1
$region0: #{logistic_regression_forward.1}
  #allocation0 [shape = 'u32[]', space=smem, size = 0x4, offset = 0x4, fixed_abs, tag = 'smem constant byte address 0x4 - core index']
  #allocation1 [shape = 'u32[144,128]{1,0:T(1,128)}', space=vmem, size = 0x12000, scoped, tag = 'internal scratch']
  %s0 = inlined_call_operand.vmem [shape: f32[8,32], index: 0, kind: input, shape index: {}]
  %s1 = inlined_call_operand.vmem [shape: f32[32,64], index: 1, kind: input, shape index: {}]
  %s2 = inlined_call_operand.vmem [shape: f32[1,64], index: 2, kind: input, shape index: {}]
  %s3 = inlined_call_operand.vmem [shape: f32[64,16], index: 3, kind: input, shape index: {}]
  %s4 = inlined_call_operand.vmem [shape: f32[1,16], index: 4, kind: input, shape index: {}]
  %s5 = inlined_call_operand.hbm [shape: f32[8,16], index: 5, kind: output, shape index: {}]
  %s6 = sld [smem:[#allocation0]]
  $region30: #{logistic_regression_forward.1} parent=0
    _
  %s8 = ssub.s32 1, %s6
  %s9 = scalar_select 0, %s8, %s6
  $region1: #{logistic_regression_forward.1} parent=0
    #allocation2 [shape = 'u8[4096]{0}', space=vmem, size = 0x1000, scoped, tag = 'output window, operand 0, single buffered']
    #allocation3 [shape = 's32[1]{0}', space=sflag, size = 0x4, scoped, tag = 'scoped memory for logistic_regression_forward.1']
    %10 = vsyncpa [#allocation3], 0
    // Predicated region
    $region2: #{logistic_regression_forward.1} parent=1 // pred_check
      _
    $region3: #{logistic_regression_forward.1} parent=1 // pred_check_branch
      %12 = sbr.rel (0) target = $region5
    $region4: #{logistic_regression_forward.1} parent=1 // pred_region
      _
    $region5: #{logistic_regression_forward.1} parent=1 // pred_fallthru
      _
    // Predicated region
    $region6: #{logistic_regression_forward.1} parent=1 // pred_check
      _
    $region7: #{logistic_regression_forward.1} parent=1 // pred_check_branch
      %14 = sbr.rel (0) target = $region9
    $region8: #{logistic_regression_forward.1} parent=1 // pred_region
      _
    $region9: #{logistic_regression_forward.1} parent=1 // pred_fallthru
      _
    // Predicated region
    $region10: #{logistic_regression_forward.1} parent=1 // pred_check
      _
    $region11: #{logistic_regression_forward.1} parent=1 // pred_check_branch
      %16 = sbr.rel (0) target = $region13
    $region12: #{logistic_regression_forward.1} parent=1 // pred_region
      _
    $region13: #{logistic_regression_forward.1} parent=1 // pred_fallthru
      _
    // Predicated region
    $region14: #{logistic_regression_forward.1} parent=1 // pred_check
      _
    $region15: #{logistic_regression_forward.1} parent=1 // pred_check_branch
      %18 = sbr.rel (0) target = $region17
    $region16: #{logistic_regression_forward.1} parent=1 // pred_region
      _
    $region17: #{logistic_regression_forward.1} parent=1 // pred_fallthru
      _
    // Predicated region
    $region18: #{logistic_regression_forward.1} parent=1 // pred_check
      _
    $region19: #{logistic_regression_forward.1} parent=1 // pred_check_branch
      %20 = sbr.rel (0) target = $region21
    $region20: #{logistic_regression_forward.1} parent=1 // pred_region
      _
    $region21: #{logistic_regression_forward.1} parent=1 // pred_fallthru
      _
    %v21 = vld [vmem:[%s0] sm:$0xff]
    %v22 = vld [vmem:[%s1] sm:$0xff]
    %v23 = vld [vmem:[%s1 + $0x8] sm:$0xff]
    %v24 = vld [vmem:[%s1 + $0x10] sm:$0xff]
    %v25 = vld [vmem:[%s1 + $0x18] sm:$0xff]
    %v26 = vld [vmem:[%s2] sm:$0x1]
    %v28 = vlaneseq
    %v29 = vshrl.u32 %v28, 7
    %v30 = vsub.s32 0, %v29
    %v31 = vrot.slane %v26, %v30
    %vm33 = vcmask 261120
    %v35 = vsel %vm33, %v21, 0
    %37 = vmatprep.subr.mxu0 0.0
    %38 = vmatpush1.msra.mxu0 %v22
    %39 = vmatprep.subr.mxu0 0.0
    %40 = vmatpush1.msra.mxu0 %v23
    %41 = vmatprep.subr.mxu0 0.0
    %42 = vmatpush1.msra.mxu0 %v24
    %43 = vmatprep.subr.mxu0 0.0
    %44 = vmatpush1.msra.mxu0 %v25
    %45 = vmatprep.subr.mxu0 0.0
    %46 = vmatpush1.msra.mxu0 0.0
    %47 = vmatprep.subr.mxu0 0.0
    %48 = vmatpush1.msra.mxu0 0.0
    %49 = vmatprep.subr.mxu0 0.0
    %50 = vmatpush1.msra.mxu0 0.0
    %51 = vmatprep.subr.mxu0 0.0
    %52 = vmatpush1.msra.mxu0 0.0
    %53 = vmatprep.subr.mxu0 0.0
    %54 = vmatpush1.msra.mxu0 0.0
    %55 = vmatprep.subr.mxu0 0.0
    %56 = vmatpush1.msra.mxu0 0.0
    %57 = vmatprep.subr.mxu0 0.0
    %58 = vmatpush1.msra.mxu0 0.0
    %59 = vmatprep.subr.mxu0 0.0
    %60 = vmatpush1.msra.mxu0 0.0
    %61 = vmatprep.subr.mxu0 0.0
    %62 = vmatpush1.msra.mxu0 0.0
    %63 = vmatprep.subr.mxu0 0.0
    %64 = vmatpush1.msra.mxu0 0.0
    %65 = vmatprep.subr.mxu0 0.0
    %66 = vmatpush1.msra.mxu0 0.0
    %67 = vmatprep.subr.mxu0 0.0
    %68 = vmatpush1.msra.mxu0 0.0
    %69 = vmatprep.subr.mxu0 0.0
    %70 = vmatpush1.msra.mxu0 0.0
    %71 = vmatprep.subr.mxu0 0.0
    %72 = vmatpush1.msra.mxu0 0.0
    %73 = vmatprep.subr.mxu0 0.0
    %74 = vmatpush1.msra.mxu0 0.0
    %75 = vmatprep.subr.mxu0 0.0
    %76 = vmatpush1.msra.mxu0 0.0
    %77 = vmatprep.subr.mxu0 0.0
    %78 = vmatpush1.msra.mxu0 0.0
    %79 = vmatprep.subr.mxu0 0.0
    %80 = vmatpush1.msra.mxu0 0.0
    %81 = vmatprep.subr.mxu0 0.0
    %82 = vmatpush1.msra.mxu0 0.0
    %83 = vmatprep.subr.mxu0 0.0
    %84 = vmatpush1.msra.mxu0 0.0
    %85 = vmatprep.subr.mxu0 0.0
    %86 = vmatpush1.msra.mxu0 0.0
    %87 = vmatprep.subr.mxu0 0.0
    %88 = vmatpush1.msra.mxu0 0.0
    %89 = vmatprep.subr.mxu0 0.0
    %90 = vmatpush1.msra.mxu0 0.0
    %91 = vmatprep.subr.mxu0 0.0
    %92 = vmatpush1.msra.mxu0 0.0
    %93 = vmatprep.subr.mxu0 0.0
    %94 = vmatpush1.msra.mxu0 0.0
    %95 = vmatprep.subr.mxu0 0.0
    %96 = vmatpush1.msra.mxu0 0.0
    %97 = vmatprep.subr.mxu0 0.0
    %98 = vmatpush1.msra.mxu0 0.0
    %99 = vmatprep.subr.mxu0 0.0
    %100 = vmatpush1.msra.mxu0 0.0
    %101 = vmatprep.mubr.f32.mxu0 0.0
    %102 = vmatmul.mubr.f32.gmra.mrb[0].mxu0 %v35
    %v103 = vpop.f32.mrb[0].mxu0
    %v104 = vadd.f32 %v31, %v103
    %v105 = vpop.f32.mrb[0].mxu0
    %106 = vdwg.mxu0
    %v107 = vmax.f32 %v104, 0.0
    %v108 = vld [vmem:[%s3] sm:$0xff]
    %v109 = vld [vmem:[%s3 + $0x8] sm:$0xff]
    %v110 = vld [vmem:[%s3 + $0x10] sm:$0xff]
    %v111 = vld [vmem:[%s3 + $0x18] sm:$0xff]
    %v112 = vld [vmem:[%s3 + $0x20] sm:$0xff]
    %v113 = vld [vmem:[%s3 + $0x28] sm:$0xff]
    %v114 = vld [vmem:[%s3 + $0x30] sm:$0xff]
    %v115 = vld [vmem:[%s3 + $0x38] sm:$0xff]
    %v116 = vld [vmem:[%s4] sm:$0x1]
    %v118 = vlaneseq
    %v119 = vshrl.u32 %v118, 7
    %v120 = vsub.s32 0, %v119
    %v121 = vrot.slane %v116, %v120
    %vm123 = vcmask 523264
    %v125 = vsel %vm123, %v107, 0
    %127 = vmatprep.subr.mxu0 0.0
    %128 = vmatpush1.msra.mxu0 %v108
    %129 = vmatprep.subr.mxu0 0.0
    %130 = vmatpush1.msra.mxu0 %v109
    %131 = vmatprep.subr.mxu0 0.0
    %132 = vmatpush1.msra.mxu0 %v110
    %133 = vmatprep.subr.mxu0 0.0
    %134 = vmatpush1.msra.mxu0 %v111
    %135 = vmatprep.subr.mxu0 0.0
    %136 = vmatpush1.msra.mxu0 %v112
    %137 = vmatprep.subr.mxu0 0.0
    %138 = vmatpush1.msra.mxu0 %v113
    %139 = vmatprep.subr.mxu0 0.0
    %140 = vmatpush1.msra.mxu0 %v114
    %141 = vmatprep.subr.mxu0 0.0
    %142 = vmatpush1.msra.mxu0 %v115
    %143 = vmatprep.subr.mxu0 0.0
    %144 = vmatpush1.msra.mxu0 0.0
    %145 = vmatprep.subr.mxu0 0.0
    %146 = vmatpush1.msra.mxu0 0.0
    %147 = vmatprep.subr.mxu0 0.0
    %148 = vmatpush1.msra.mxu0 0.0
    %149 = vmatprep.subr.mxu0 0.0
    %150 = vmatpush1.msra.mxu0 0.0
    %151 = vmatprep.subr.mxu0 0.0
    %152 = vmatpush1.msra.mxu0 0.0
    %153 = vmatprep.subr.mxu0 0.0
    %154 = vmatpush1.msra.mxu0 0.0
    %155 = vmatprep.subr.mxu0 0.0
    %156 = vmatpush1.msra.mxu0 0.0
    %157 = vmatprep.subr.mxu0 0.0
    %158 = vmatpush1.msra.mxu0 0.0
    %159 = vmatprep.subr.mxu0 0.0
    %160 = vmatpush1.msra.mxu0 0.0
    %161 = vmatprep.subr.mxu0 0.0
    %162 = vmatpush1.msra.mxu0 0.0
    %163 = vmatprep.subr.mxu0 0.0
    %164 = vmatpush1.msra.mxu0 0.0
    %165 = vmatprep.subr.mxu0 0.0
    %166 = vmatpush1.msra.mxu0 0.0
    %167 = vmatprep.subr.mxu0 0.0
    %168 = vmatpush1.msra.mxu0 0.0
    %169 = vmatprep.subr.mxu0 0.0
    %170 = vmatpush1.msra.mxu0 0.0
    %171 = vmatprep.subr.mxu0 0.0
    %172 = vmatpush1.msra.mxu0 0.0
    %173 = vmatprep.subr.mxu0 0.0
    %174 = vmatpush1.msra.mxu0 0.0
    %175 = vmatprep.subr.mxu0 0.0
    %176 = vmatpush1.msra.mxu0 0.0
    %177 = vmatprep.subr.mxu0 0.0
    %178 = vmatpush1.msra.mxu0 0.0
    %179 = vmatprep.subr.mxu0 0.0
    %180 = vmatpush1.msra.mxu0 0.0
    %181 = vmatprep.subr.mxu0 0.0
    %182 = vmatpush1.msra.mxu0 0.0
    %183 = vmatprep.subr.mxu0 0.0
    %184 = vmatpush1.msra.mxu0 0.0
    %185 = vmatprep.subr.mxu0 0.0
    %186 = vmatpush1.msra.mxu0 0.0
    %187 = vmatprep.subr.mxu0 0.0
    %188 = vmatpush1.msra.mxu0 0.0
    %189 = vmatprep.subr.mxu0 0.0
    %190 = vmatpush1.msra.mxu0 0.0
    %191 = vmatprep.mubr.f32.mxu0 0.0
    %192 = vmatmul.mubr.f32.gmra.mrb[0].mxu0 %v125
    %v193 = vpop.f32.mrb[0].mxu0
    %v194 = vadd.f32 %v121, %v193
    %v195 = vpop.f32.mrb[0].mxu0
    %196 = vdwg.mxu0
    %v197 = vmax.f32 %v194, 0.0
    %vm198 = vcmask 130048
    %199 = vst.msk [vmem:[#allocation2] sm:$0xff] %vm198, %v197
    // Predicated region
    $region22: #{logistic_regression_forward.1} parent=1 // pred_check
      _
    $region23: #{logistic_regression_forward.1} parent=1 // pred_check_branch
      %201 = sbr.rel (0) target = $region25
    $region24: #{logistic_regression_forward.1} parent=1 // pred_region
      %s203 = ssub.s32 128, 128
      %204 = vsyncadd [#allocation3], %s203
      %s206 = sshll.u32 [#allocation2], 4
      %s207 = int_to_ptr.vmem [resolvable:$true] %s206
      %209 = dma.vmem_to_hbm [thread:$0]  %s207, 128, %s5, [#allocation3]
    $region25: #{logistic_regression_forward.1} parent=1 // pred_fallthru
      _
    // Predicated region
    $region26: #{logistic_regression_forward.1} parent=1 // pred_check
      _
    $region27: #{logistic_regression_forward.1} parent=1 // pred_check_branch
      %211 = sbr.rel (0) target = $region29
    $region28: #{logistic_regression_forward.1} parent=1 // pred_region
      %212 = dma.done [#allocation3], 128
    $region29: #{logistic_regression_forward.1} parent=1 // pred_fallthru
      _
    %213 = vsyncpa [#allocation3], 1

</llo_original>
